<compile_context>
chip_gen: v7x
topology: tpu7x:2x2x1
jax: 0.10.0
libtpu: 0.0.40
codegen_flags: <defaults>
</compile_context>

<pallas_src>
import functools

import jax
import jax.numpy as jnp
from jax import lax
from jax.experimental import pallas as pl
from jax.experimental.pallas import tpu as pltpu


def _fused_conv_bn_relu_kernel(x_ref, w_ref, mask_ref, gamma_ref, beta_ref,
                               o_ref,
                               sum_ref, ssq_ref, scale_ref, shift_ref,
                               *, ksize, t_in, t_out, tn, fold_w, inv_m, eps):
    p = pl.program_id(0)    # phase: 0 = stats, 1 = BN + ReLU + store
    b = pl.program_id(1)    # batch index
    j = pl.program_id(2)    # row-tile index over N

    lanes_in = tn * t_in

    # --- init the batch-stat accumulators at the very first grid step --------
    @pl.when((p == 0) & (b == 0) & (j == 0))
    def _():
        sum_ref[...] = jnp.zeros_like(sum_ref)
        ssq_ref[...] = jnp.zeros_like(ssq_ref)

    # --- conv tile (recomputed in both phases; cheaper than an HBM roundtrip)
    # Stack the K lane-rotated tap views on the contraction axis and do ONE
    # MXU pass.  The wrapped / cross-row columns introduced by the rotation
    # only land in the discarded t >= t_out tail of each row.
    x_blk = x_ref[0]                                        # [c_in, lanes_in]
    if ksize == 1:
        xs = x_blk
    else:
        parts = [x_blk]
        for k in range(1, ksize):
            # circular left shift by k == jnp.roll(x, lanes_in - k) (XLU).
            parts.append(pltpu.roll(x_blk, shift=lanes_in - k, axis=1))
        xs = jnp.concatenate(parts, axis=0)                 # [K*c_in, lanes_in]
    y_full = jnp.dot(w_ref[...], xs,
                     preferred_element_type=jnp.float32)    # [c_out, lanes_in]

    # --- phase 0: masked, lane-folded stat accumulation (VPU only) -----------
    @pl.when(p == 0)
    def _():
        if t_out == t_in:
            ym = y_full
        else:
            ym = y_full * mask_ref[...]      # zero the K-1 tail cols per row
        n_chunks = lanes_in // fold_w
        for c in range(n_chunks):            # lane-aligned 128-wide chunks
            chunk = ym[:, c * fold_w:(c + 1) * fold_w]
            sum_ref[...] += chunk
            ssq_ref[...] += chunk * chunk

    # --- first phase-1 step: fold batch stats into a per-channel affine ------
    @pl.when((p == 1) & (b == 0) & (j == 0))
    def _():
        tot = jnp.sum(sum_ref[...], axis=1, keepdims=True)    # [c_out, 1]
        tot2 = jnp.sum(ssq_ref[...], axis=1, keepdims=True)   # [c_out, 1]
        mean = tot * inv_m
        var = jnp.maximum(tot2 * inv_m - mean * mean, 0.0)    # biased, clamped
        inv_std = lax.rsqrt(var + eps)
        scale_ref[...] = gamma_ref[...] * inv_std
        shift_ref[...] = beta_ref[...] - mean * gamma_ref[...] * inv_std

    # --- phase 1: compact to valid columns, BN affine + ReLU, lane-dense store
    @pl.when(p == 1)
    def _():
        if t_out == t_in:
            y = y_full
        else:
            y = jnp.concatenate(
                [y_full[:, nn * t_in: nn * t_in + t_out] for nn in range(tn)],
                axis=1)                                     # [c_out, tn*t_out]
        o_ref[0] = jnp.maximum(
            y * scale_ref[...] + shift_ref[...], 0.0).astype(o_ref.dtype)


def _vmem_capacity_bytes():
    """Best-effort VMEM capacity query; conservative fallback (v7x-sized)."""
    try:
        fn = getattr(pltpu, "get_tpu_info", None)
        if fn is not None:
            cap = getattr(fn(), "vmem_capacity_bytes", None)
            if cap:
                return int(cap)
    except Exception:
        pass
    return 64 * 1024 * 1024


def _pick_row_tile(N, T, T_out, c_in, c_out, budget_bytes):
    """Largest layout-legal divisor of N whose in+out block fits the budget."""
    legal = []
    for tn in range(1, N + 1):
        if N % tn:
            continue
        if tn == N or (tn * T % 128 == 0 and tn * T_out % 128 == 0):
            legal.append(tn)
    blk_bytes = lambda tn: 4 * tn * (c_in * T + c_out * T_out)
    fitting = [tn for tn in legal if blk_bytes(tn) <= budget_bytes]
    return max(fitting) if fitting else min(legal)


def basic_conv2d_forward(x, weight, bias, gamma, beta, *, eps=1e-3):
    """x: [B, c_in, N, T]; weight: [c_out, c_in, 1, K]; -> [B, c_out, N, T_out].

    `bias` is accepted for API parity but intentionally not used: a conv bias
    followed by train-mode BatchNorm is mathematically a no-op.
    """
    del bias  # absorbed exactly by the batch-norm mean.
    B, c_in, N, T = x.shape
    c_out, c_in2, kh, K = weight.shape
    assert kh == 1 and c_in2 == c_in
    T_out = T - K + 1
    assert T_out >= 1
    M = B * N * T_out

    # ---- generation-aware tile / VMEM budgets --------------------------------
    cap = _vmem_capacity_bytes()
    if cap <= 64 * 1024 * 1024:                    # v7x-class: 64 MiB / TC
        budget_bytes, vmem_limit = 4 * 1024 * 1024, 48 * 1024 * 1024
    else:                                          # v5e / v6e: 128 MiB
        budget_bytes, vmem_limit = 10 * 1024 * 1024, 96 * 1024 * 1024

    tn = _pick_row_tile(N, T, T_out, c_in, c_out, budget_bytes)
    lanes_in = tn * T
    lanes_out = tn * T_out
    n_tiles = N // tn
    fold_w = 128 if lanes_in % 128 == 0 else lanes_in

    # ---- glue (all cheap / metadata-only) ------------------------------------
    cdt = jnp.bfloat16 if x.dtype == jnp.bfloat16 else jnp.float32
    xg = x.reshape(B, c_in, N * T).astype(cdt)                 # free reshape
    # Single [c_out, K*c_in] weight matrix matching the in-kernel tap stacking.
    w2 = jnp.transpose(weight[:, :, 0, :], (0, 2, 1)).reshape(
        c_out, K * c_in).astype(cdt)
    g2 = gamma.reshape(c_out, 1).astype(jnp.float32)
    b2 = beta.reshape(c_out, 1).astype(jnp.float32)
    # Per-lane validity mask (periodic with period T); tiny resident input.
    mask = (jnp.arange(lanes_in) % T < T_out).astype(jnp.float32).reshape(
        1, lanes_in)

    kernel = functools.partial(
        _fused_conv_bn_relu_kernel,
        ksize=K, t_in=T, t_out=T_out, tn=tn, fold_w=fold_w,
        inv_m=1.0 / M, eps=float(eps))

    out3 = pl.pallas_call(
        kernel,
        out_shape=jax.ShapeDtypeStruct((B, c_out, N * T_out), jnp.float32),
        grid_spec=pltpu.PrefetchScalarGridSpec(
            num_scalar_prefetch=0,
            grid=(2, B, n_tiles),
            in_specs=[
                # x rows for this (batch, row-tile); full T lanes (incl. halo).
                pl.BlockSpec((1, c_in, lanes_in), lambda p, b, j: (b, 0, j)),
                # fused tap-weight matrix, resident.
                pl.BlockSpec((c_out, K * c_in), lambda p, b, j: (0, 0)),
                # valid-column mask, resident.
                pl.BlockSpec((1, lanes_in), lambda p, b, j: (0, 0)),
                pl.BlockSpec((c_out, 1), lambda p, b, j: (0, 0)),
                pl.BlockSpec((c_out, 1), lambda p, b, j: (0, 0)),
            ],
            # Phase 0 never writes the output: keep the block index constant
            # (0,0,0) through ALL of phase 0 so no unwritten block is ever
            # written back to HBM; phase 1 then streams real blocks.
            out_specs=pl.BlockSpec((1, c_out, lanes_out),
                                   lambda p, b, j: (b * p, 0, j * p)),
            scratch_shapes=[
                pltpu.VMEM((c_out, fold_w), jnp.float32),   # lane-folded sum
                pltpu.VMEM((c_out, fold_w), jnp.float32),   # lane-folded ssq
                pltpu.VMEM((c_out, 1), jnp.float32),        # BN scale
                pltpu.VMEM((c_out, 1), jnp.float32),        # BN shift
            ],
        ),
        compiler_params=pltpu.CompilerParams(
            # Fused batch-stats make every axis a cross-tile dependency.
            dimension_semantics=("arbitrary", "arbitrary", "arbitrary"),
            vmem_limit_bytes=vmem_limit,
        ),
    )(xg, w2, mask, g2, b2)

    # Free reshape: [B, c_out, N*T_out] -> [B, c_out, N, T_out] (no transpose).
    return out3.reshape(B, c_out, N, T_out)


# Pure-JAX reference (for correctness check only; keeps the conv bias to show
# it is absorbed by train-mode BatchNorm).
def _ref_forward(x, weight, bias, gamma, beta, eps=1e-3):
    y = lax.conv_general_dilated(
        x, weight, window_strides=(1, 1), padding=((0, 0), (0, 0)),
        dimension_numbers=("NCHW", "OIHW", "NCHW"))
    y = y + bias[None, :, None, None]
    mean = y.mean(axis=(0, 2, 3), keepdims=True)
    var = y.var(axis=(0, 2, 3), keepdims=True)
    yn = (y - mean) * lax.rsqrt(var + eps)
    yn = yn * gamma[None, :, None, None] + beta[None, :, None, None]
    return jnp.maximum(yn, 0.0)


if __name__ == "__main__":
    B, c_in, c_out, N, T, K = 2, 4, 8, 16, 16, 3

    key = jax.random.PRNGKey(0)
    kx, kw, kb, kg, kbe = jax.random.split(key, 5)

    x = jax.random.normal(kx, (B, c_in, N, T), dtype=jnp.float32)
    weight = jax.random.normal(kw, (c_out, c_in, 1, K), dtype=jnp.float32) * 0.1
    bias = jax.random.normal(kb, (c_out,), dtype=jnp.float32) * 0.1
    gamma = 1.0 + 0.1 * jax.random.normal(kg, (c_out,), dtype=jnp.float32)
    beta = 0.1 * jax.random.normal(kbe, (c_out,), dtype=jnp.float32)

    out = basic_conv2d_forward(x, weight, bias, gamma, beta, eps=1e-3)
    out = jax.block_until_ready(out)

    ref = _ref_forward(x, weight, bias, gamma, beta, eps=1e-3)
    assert out.shape == (B, c_out, N, T - K + 1), out.shape
    max_err = float(jnp.max(jnp.abs(out - ref)))
    assert max_err < 2e-3, max_err

    print("KERNEL_OK")
</pallas_src>

<mosaic_0001>
module attributes {stable_mosaic.version = 11 : i64} {
  func.func @_fused_conv_bn_relu_kernel(%arg0: i32, %arg1: i32, %arg2: i32, %arg3: memref<1x4x256xf32, #tpu.memory_space<vmem>>, %arg4: memref<8x12xf32, #tpu.memory_space<vmem>>, %arg5: memref<1x256xf32, #tpu.memory_space<vmem>>, %arg6: memref<8x1xf32, #tpu.memory_space<vmem>>, %arg7: memref<8x1xf32, #tpu.memory_space<vmem>>, %arg8: memref<1x8x224xf32, #tpu.memory_space<vmem>>, %arg9: memref<8x128xf32, #tpu.memory_space<vmem>>, %arg10: memref<8x128xf32, #tpu.memory_space<vmem>>, %arg11: memref<8x1xf32, #tpu.memory_space<vmem>>, %arg12: memref<8x1xf32, #tpu.memory_space<vmem>>) attributes {dimension_semantics = [#tpu.dimension_semantics<arbitrary>, #tpu.dimension_semantics<arbitrary>, #tpu.dimension_semantics<arbitrary>], iteration_bounds = array<i64: 2, 2, 1>, scalar_prefetch = 0 : i64, scratch_operands = 4 : i64, tpu.core_type = #tpu.core_type<tc>, window_params = [{transform_indices = @transform_0, window_bounds = array<i64: 1, 4, 256>}, {pipeline_mode = #tpu.pipeline_mode<synchronous>, transform_indices = @transform_1, window_bounds = array<i64: 8, 12>}, {pipeline_mode = #tpu.pipeline_mode<synchronous>, transform_indices = @transform_2, window_bounds = array<i64: 1, 256>}, {pipeline_mode = #tpu.pipeline_mode<synchronous>, transform_indices = @transform_3, window_bounds = array<i64: 8, 1>}, {pipeline_mode = #tpu.pipeline_mode<synchronous>, transform_indices = @transform_4, window_bounds = array<i64: 8, 1>}, {transform_indices = @transform_5, window_bounds = array<i64: 1, 8, 224>}]} {
    %c0_i32 = arith.constant 0 : i32
    %0 = arith.cmpi eq, %arg0, %c0_i32 : i32
    %c0_i32_0 = arith.constant 0 : i32
    %1 = arith.cmpi eq, %arg1, %c0_i32_0 : i32
    %2 = arith.andi %0, %1 : i1
    %c0_i32_1 = arith.constant 0 : i32
    %3 = arith.cmpi eq, %arg2, %c0_i32_1 : i32
    %4 = arith.andi %2, %3 : i1
    %5 = arith.extui %4 : i1 to i32
    %c0_i32_2 = arith.constant 0 : i32
    %6 = arith.cmpi ne, %5, %c0_i32_2 : i32
    scf.if %6 {
      %cst_14 = arith.constant 0.000000e+00 : f32
      %27 = vector.broadcast %cst_14 : f32 to vector<8x128xf32>
      %c0_15 = arith.constant 0 : index
      %c0_16 = arith.constant 0 : index
      %28 = vector.load %arg9[%c0_15, %c0_16] : memref<8x128xf32, #tpu.memory_space<vmem>>, vector<8x128xf32>
      tpu.vector_store %arg9[%c0_15, %c0_16], %27 {strides = array<i32>} : memref<8x128xf32, #tpu.memory_space<vmem>>, vector<8x128xf32>,
      %cst_17 = arith.constant 0.000000e+00 : f32
      %29 = vector.broadcast %cst_17 : f32 to vector<8x128xf32>
      %c0_18 = arith.constant 0 : index
      %c0_19 = arith.constant 0 : index
      %30 = vector.load %arg10[%c0_18, %c0_19] : memref<8x128xf32, #tpu.memory_space<vmem>>, vector<8x128xf32>
      tpu.vector_store %arg10[%c0_18, %c0_19], %29 {strides = array<i32>} : memref<8x128xf32, #tpu.memory_space<vmem>>, vector<8x128xf32>,
    } else {
    }
    %c0 = arith.constant 0 : index
    %c0_3 = arith.constant 0 : index
    %c0_4 = arith.constant 0 : index
    %7 = vector.load %arg3[%c0, %c0_3, %c0_4] : memref<1x4x256xf32, #tpu.memory_space<vmem>>, vector<1x4x256xf32>
    %8 = vector.shape_cast %7 : vector<1x4x256xf32> to vector<4x256xf32>
    %c255_i32 = arith.constant 255 : i32
    %9 = tpu.dynamic_rotate %8 by %c255_i32 dim 1 : vector<4x256xf32>, i32 -> vector<4x256xf32>
    %c254_i32 = arith.constant 254 : i32
    %10 = tpu.dynamic_rotate %8 by %c254_i32 dim 1 : vector<4x256xf32>, i32 -> vector<4x256xf32>
    %11 = tpu.concatenate %8, %9, %10 in 0 : vector<4x256xf32>, vector<4x256xf32>, vector<4x256xf32> -> vector<12x256xf32>
    %c0_5 = arith.constant 0 : index
    %c0_6 = arith.constant 0 : index
    %12 = vector.load %arg4[%c0_5, %c0_6] : memref<8x12xf32, #tpu.memory_space<vmem>>, vector<8x12xf32>
    %cst = arith.constant dense<0.000000e+00> : vector<8x256xf32>
    %13 = tpu.matmul %12, %11, %cst {dimension_numbers = #tpu.dot_dimension_numbers<[1], [0], [0], [1], [0, 0, 1, 1], [], []>} : vector<8x12xf32>, vector<12x256xf32>, vector<8x256xf32> -> vector<8x256xf32>
    %c0_i32_7 = arith.constant 0 : i32
    %14 = arith.cmpi eq, %arg0, %c0_i32_7 : i32
    %15 = arith.extui %14 : i1 to i32
    %c0_i32_8 = arith.constant 0 : i32
    %16 = arith.cmpi ne, %15, %c0_i32_8 : i32
    scf.if %16 {
      %c0_14 = arith.constant 0 : index
      %c0_15 = arith.constant 0 : index
      %27 = vector.load %arg5[%c0_14, %c0_15] : memref<1x256xf32, #tpu.memory_space<vmem>>, vector<1x256xf32>
      %28 = vector.broadcast %27 : vector<1x256xf32> to vector<8x256xf32>
      %29 = arith.mulf %13, %28 : vector<8x256xf32>
      %30 = vector.extract_strided_slice %29 {offsets = [0, 0], sizes = [8, 128], strides = [1, 1]} : vector<8x256xf32> to vector<8x128xf32>
      %c0_16 = arith.constant 0 : index
      %c0_17 = arith.constant 0 : index
      %31 = vector.load %arg9[%c0_16, %c0_17] : memref<8x128xf32, #tpu.memory_space<vmem>>, vector<8x128xf32>
      %32 = arith.addf %31, %30 : vector<8x128xf32>
      %c0_18 = arith.constant 0 : index
      %c0_19 = arith.constant 0 : index
      %33 = vector.load %arg9[%c0_18, %c0_19] : memref<8x128xf32, #tpu.memory_space<vmem>>, vector<8x128xf32>
      tpu.vector_store %arg9[%c0_18, %c0_19], %32 {strides = array<i32>} : memref<8x128xf32, #tpu.memory_space<vmem>>, vector<8x128xf32>,
      %c0_20 = arith.constant 0 : index
      %c0_21 = arith.constant 0 : index
      %34 = vector.load %arg10[%c0_20, %c0_21] : memref<8x128xf32, #tpu.memory_space<vmem>>, vector<8x128xf32>
      %35 = arith.mulf %30, %30 : vector<8x128xf32>
      %36 = arith.addf %34, %35 : vector<8x128xf32>
      %c0_22 = arith.constant 0 : index
      %c0_23 = arith.constant 0 : index
      %37 = vector.load %arg10[%c0_22, %c0_23] : memref<8x128xf32, #tpu.memory_space<vmem>>, vector<8x128xf32>
      tpu.vector_store %arg10[%c0_22, %c0_23], %36 {strides = array<i32>} : memref<8x128xf32, #tpu.memory_space<vmem>>, vector<8x128xf32>,
      %38 = vector.extract_strided_slice %29 {offsets = [0, 128], sizes = [8, 128], strides = [1, 1]} : vector<8x256xf32> to vector<8x128xf32>
      %c0_24 = arith.constant 0 : index
      %c0_25 = arith.constant 0 : index
      %39 = vector.load %arg9[%c0_24, %c0_25] : memref<8x128xf32, #tpu.memory_space<vmem>>, vector<8x128xf32>
      %40 = arith.addf %39, %38 : vector<8x128xf32>
      %c0_26 = arith.constant 0 : index
      %c0_27 = arith.constant 0 : index
      %41 = vector.load %arg9[%c0_26, %c0_27] : memref<8x128xf32, #tpu.memory_space<vmem>>, vector<8x128xf32>
      tpu.vector_store %arg9[%c0_26, %c0_27], %40 {strides = array<i32>} : memref<8x128xf32, #tpu.memory_space<vmem>>, vector<8x128xf32>,
      %c0_28 = arith.constant 0 : index
      %c0_29 = arith.constant 0 : index
      %42 = vector.load %arg10[%c0_28, %c0_29] : memref<8x128xf32, #tpu.memory_space<vmem>>, vector<8x128xf32>
      %43 = arith.mulf %38, %38 : vector<8x128xf32>
      %44 = arith.addf %42, %43 : vector<8x128xf32>
      %c0_30 = arith.constant 0 : index
      %c0_31 = arith.constant 0 : index
      %45 = vector.load %arg10[%c0_30, %c0_31] : memref<8x128xf32, #tpu.memory_space<vmem>>, vector<8x128xf32>
      tpu.vector_store %arg10[%c0_30, %c0_31], %44 {strides = array<i32>} : memref<8x128xf32, #tpu.memory_space<vmem>>, vector<8x128xf32>,
    } else {
    }
    %c1_i32 = arith.constant 1 : i32
    %17 = arith.cmpi eq, %arg0, %c1_i32 : i32
    %c0_i32_9 = arith.constant 0 : i32
    %18 = arith.cmpi eq, %arg1, %c0_i32_9 : i32
    %19 = arith.andi %17, %18 : i1
    %c0_i32_10 = arith.constant 0 : i32
    %20 = arith.cmpi eq, %arg2, %c0_i32_10 : i32
    %21 = arith.andi %19, %20 : i1
    %22 = arith.extui %21 : i1 to i32
    %c0_i32_11 = arith.constant 0 : i32
    %23 = arith.cmpi ne, %22, %c0_i32_11 : i32
    scf.if %23 {
      %c0_14 = arith.constant 0 : index
      %c0_15 = arith.constant 0 : index
      %27 = vector.load %arg9[%c0_14, %c0_15] : memref<8x128xf32, #tpu.memory_space<vmem>>, vector<8x128xf32>
      %cst_16 = arith.constant dense<0.000000e+00> : vector<8xf32>
      %28 = vector.multi_reduction <add>, %27, %cst_16 [1] : vector<8x128xf32> to vector<8xf32>
      %29 = vector.shape_cast %28 : vector<8xf32> to vector<8x1xf32>
      %c0_17 = arith.constant 0 : index
      %c0_18 = arith.constant 0 : index
      %30 = vector.load %arg10[%c0_17, %c0_18] : memref<8x128xf32, #tpu.memory_space<vmem>>, vector<8x128xf32>
      %cst_19 = arith.constant dense<0.000000e+00> : vector<8xf32>
      %31 = vector.multi_reduction <add>, %30, %cst_19 [1] : vector<8x128xf32> to vector<8xf32>
      %32 = vector.shape_cast %31 : vector<8xf32> to vector<8x1xf32>
      %cst_20 = arith.constant 0.00223214296 : f32
      %33 = vector.broadcast %cst_20 : f32 to vector<8x1xf32>
      %34 = arith.mulf %29, %33 : vector<8x1xf32>
      %cst_21 = arith.constant 0.00223214296 : f32
      %35 = vector.broadcast %cst_21 : f32 to vector<8x1xf32>
      %36 = arith.mulf %32, %35 : vector<8x1xf32>
      %37 = arith.mulf %34, %34 : vector<8x1xf32>
      %38 = arith.subf %36, %37 : vector<8x1xf32>
      %cst_22 = arith.constant 0.000000e+00 : f32
      %39 = vector.broadcast %cst_22 : f32 to vector<8x1xf32>
      %40 = arith.maximumf %38, %39 : vector<8x1xf32>
      %cst_23 = arith.constant 1.000000e-03 : f32
      %41 = vector.broadcast %cst_23 : f32 to vector<8x1xf32>
      %42 = arith.addf %40, %41 : vector<8x1xf32>
      %43 = math.rsqrt %42 : vector<8x1xf32>
      %c0_24 = arith.constant 0 : index
      %c0_25 = arith.constant 0 : index
      %44 = vector.load %arg6[%c0_24, %c0_25] : memref<8x1xf32, #tpu.memory_space<vmem>>, vector<8x1xf32>
      %45 = arith.mulf %44, %43 : vector<8x1xf32>
      %c0_26 = arith.constant 0 : index
      %c0_27 = arith.constant 0 : index
      %46 = vector.load %arg11[%c0_26, %c0_27] : memref<8x1xf32, #tpu.memory_space<vmem>>, vector<8x1xf32>
      tpu.vector_store %arg11[%c0_26, %c0_27], %45 {strides = array<i32>} : memref<8x1xf32, #tpu.memory_space<vmem>>, vector<8x1xf32>,
      %c0_28 = arith.constant 0 : index
      %c0_29 = arith.constant 0 : index
      %47 = vector.load %arg7[%c0_28, %c0_29] : memref<8x1xf32, #tpu.memory_space<vmem>>, vector<8x1xf32>
      %c0_30 = arith.constant 0 : index
      %c0_31 = arith.constant 0 : index
      %48 = vector.load %arg6[%c0_30, %c0_31] : memref<8x1xf32, #tpu.memory_space<vmem>>, vector<8x1xf32>
      %49 = arith.mulf %34, %48 : vector<8x1xf32>
      %50 = arith.mulf %49, %43 : vector<8x1xf32>
      %51 = arith.subf %47, %50 : vector<8x1xf32>
      %c0_32 = arith.constant 0 : index
      %c0_33 = arith.constant 0 : index
      %52 = vector.load %arg12[%c0_32, %c0_33] : memref<8x1xf32, #tpu.memory_space<vmem>>, vector<8x1xf32>
      tpu.vector_store %arg12[%c0_32, %c0_33], %51 {strides = array<i32>} : memref<8x1xf32, #tpu.memory_space<vmem>>, vector<8x1xf32>,
    } else {
    }
    %c1_i32_12 = arith.constant 1 : i32
    %24 = arith.cmpi eq, %arg0, %c1_i32_12 : i32
    %25 = arith.extui %24 : i1 to i32
    %c0_i32_13 = arith.constant 0 : i32
    %26 = arith.cmpi ne, %25, %c0_i32_13 : i32
    scf.if %26 {
      %27 = vector.extract_strided_slice %13 {offsets = [0, 0], sizes = [8, 14], strides = [1, 1]} : vector<8x256xf32> to vector<8x14xf32>
      %28 = vector.extract_strided_slice %13 {offsets = [0, 16], sizes = [8, 14], strides = [1, 1]} : vector<8x256xf32> to vector<8x14xf32>
      %29 = vector.extract_strided_slice %13 {offsets = [0, 32], sizes = [8, 14], strides = [1, 1]} : vector<8x256xf32> to vector<8x14xf32>
      %30 = vector.extract_strided_slice %13 {offsets = [0, 48], sizes = [8, 14], strides = [1, 1]} : vector<8x256xf32> to vector<8x14xf32>
      %31 = vector.extract_strided_slice %13 {offsets = [0, 64], sizes = [8, 14], strides = [1, 1]} : vector<8x256xf32> to vector<8x14xf32>
      %32 = vector.extract_strided_slice %13 {offsets = [0, 80], sizes = [8, 14], strides = [1, 1]} : vector<8x256xf32> to vector<8x14xf32>
      %33 = vector.extract_strided_slice %13 {offsets = [0, 96], sizes = [8, 14], strides = [1, 1]} : vector<8x256xf32> to vector<8x14xf32>
      %34 = vector.extract_strided_slice %13 {offsets = [0, 112], sizes = [8, 14], strides = [1, 1]} : vector<8x256xf32> to vector<8x14xf32>
      %35 = vector.extract_strided_slice %13 {offsets = [0, 128], sizes = [8, 14], strides = [1, 1]} : vector<8x256xf32> to vector<8x14xf32>
      %36 = vector.extract_strided_slice %13 {offsets = [0, 144], sizes = [8, 14], strides = [1, 1]} : vector<8x256xf32> to vector<8x14xf32>
      %37 = vector.extract_strided_slice %13 {offsets = [0, 160], sizes = [8, 14], strides = [1, 1]} : vector<8x256xf32> to vector<8x14xf32>
      %38 = vector.extract_strided_slice %13 {offsets = [0, 176], sizes = [8, 14], strides = [1, 1]} : vector<8x256xf32> to vector<8x14xf32>
      %39 = vector.extract_strided_slice %13 {offsets = [0, 192], sizes = [8, 14], strides = [1, 1]} : vector<8x256xf32> to vector<8x14xf32>
      %40 = vector.extract_strided_slice %13 {offsets = [0, 208], sizes = [8, 14], strides = [1, 1]} : vector<8x256xf32> to vector<8x14xf32>
      %41 = vector.extract_strided_slice %13 {offsets = [0, 224], sizes = [8, 14], strides = [1, 1]} : vector<8x256xf32> to vector<8x14xf32>
      %42 = vector.extract_strided_slice %13 {offsets = [0, 240], sizes = [8, 14], strides = [1, 1]} : vector<8x256xf32> to vector<8x14xf32>
      %43 = tpu.concatenate %27, %28, %29, %30, %31, %32, %33, %34, %35, %36, %37, %38, %39, %40, %41, %42 in 1 : vector<8x14xf32>, vector<8x14xf32>, vector<8x14xf32>, vector<8x14xf32>, vector<8x14xf32>, vector<8x14xf32>, vector<8x14xf32>, vector<8x14xf32>, vector<8x14xf32>, vector<8x14xf32>, vector<8x14xf32>, vector<8x14xf32>, vector<8x14xf32>, vector<8x14xf32>, vector<8x14xf32>, vector<8x14xf32> -> vector<8x224xf32>
      %c0_14 = arith.constant 0 : index
      %c0_15 = arith.constant 0 : index
      %44 = vector.load %arg11[%c0_14, %c0_15] : memref<8x1xf32, #tpu.memory_space<vmem>>, vector<8x1xf32>
      %45 = vector.broadcast %44 : vector<8x1xf32> to vector<8x224xf32>
      %46 = arith.mulf %43, %45 : vector<8x224xf32>
      %c0_16 = arith.constant 0 : index
      %c0_17 = arith.constant 0 : index
      %47 = vector.load %arg12[%c0_16, %c0_17] : memref<8x1xf32, #tpu.memory_space<vmem>>, vector<8x1xf32>
      %48 = vector.broadcast %47 : vector<8x1xf32> to vector<8x224xf32>
      %49 = arith.addf %46, %48 : vector<8x224xf32>
      %cst_18 = arith.constant 0.000000e+00 : f32
      %50 = vector.broadcast %cst_18 : f32 to vector<8x224xf32>
      %51 = arith.maximumf %49, %50 : vector<8x224xf32>
      %c0_19 = arith.constant 0 : index
      %c0_20 = arith.constant 0 : index
      %c0_21 = arith.constant 0 : index
      %52 = vector.load %arg8[%c0_19, %c0_20, %c0_21] : memref<1x8x224xf32, #tpu.memory_space<vmem>>, vector<1x8x224xf32>
      %53 = vector.shape_cast %52 : vector<1x8x224xf32> to vector<8x224xf32>
      %54 = vector.shape_cast %51 : vector<8x224xf32> to vector<1x8x224xf32>
      tpu.vector_store %arg8[%c0_19, %c0_20, %c0_21], %54 {strides = array<i32>} : memref<1x8x224xf32, #tpu.memory_space<vmem>>, vector<1x8x224xf32>,
    } else {
    }
    return
  }
  func.func @transform_0(%arg0: i32, %arg1: i32, %arg2: i32) -> (i32, i32, i32) {
    %c0_i32 = arith.constant 0 : i32
    %c0_i32_0 = arith.constant 0 : i32
    return %arg1, %c0_i32, %arg2 : i32, i32, i32
  }
  func.func @transform_1(%arg0: i32, %arg1: i32, %arg2: i32) -> (i32, i32) {
    %c0_i32 = arith.constant 0 : i32
    %c0_i32_0 = arith.constant 0 : i32
    %c0_i32_1 = arith.constant 0 : i32
    return %c0_i32, %c0_i32_0 : i32, i32
  }
  func.func @transform_2(%arg0: i32, %arg1: i32, %arg2: i32) -> (i32, i32) {
    %c0_i32 = arith.constant 0 : i32
    %c0_i32_0 = arith.constant 0 : i32
    %c0_i32_1 = arith.constant 0 : i32
    return %c0_i32, %c0_i32_0 : i32, i32
  }
  func.func @transform_3(%arg0: i32, %arg1: i32, %arg2: i32) -> (i32, i32) {
    %c0_i32 = arith.constant 0 : i32
    %c0_i32_0 = arith.constant 0 : i32
    %c0_i32_1 = arith.constant 0 : i32
    return %c0_i32, %c0_i32_0 : i32, i32
  }
  func.func @transform_4(%arg0: i32, %arg1: i32, %arg2: i32) -> (i32, i32) {
    %c0_i32 = arith.constant 0 : i32
    %c0_i32_0 = arith.constant 0 : i32
    %c0_i32_1 = arith.constant 0 : i32
    return %c0_i32, %c0_i32_0 : i32, i32
  }
  func.func @transform_5(%arg0: i32, %arg1: i32, %arg2: i32) -> (i32, i32, i32) {
    %0 = arith.muli %arg1, %arg0 : i32
    %1 = arith.muli %arg2, %arg0 : i32
    %c0_i32 = arith.constant 0 : i32
    %c0_i32_0 = arith.constant 0 : i32
    return %0, %c0_i32, %1 : i32, i32, i32
  }
}

</mosaic_0001>

<llo_original>
// kernel: tpu_custom_call.1
$region0: #{tpu_custom_call.1}
  #allocation0 [shape = 'u32[]', space=smem, size = 0x4, offset = 0x4, fixed_abs, tag = 'smem constant byte address 0x4 - core index']
  #allocation1 [shape = 'u32[144,128]{1,0:T(1,128)}', space=vmem, size = 0x12000, scoped, tag = 'internal scratch']
  #allocation2 [shape = 'f32[8,128]{1,0:T(8,128)}', space=vmem, size = 0x1000, scoped, tag = 'scratch operand']
  #allocation3 [shape = 'f32[8,128]{1,0:T(8,128)}', space=vmem, size = 0x1000, scoped, tag = 'scratch operand']
  #allocation4 [shape = 'f32[8,1]{1,0:T(8,128)}', space=vmem, size = 0x1000, scoped, tag = 'scratch operand']
  #allocation5 [shape = 'f32[8,1]{1,0:T(8,128)}', space=vmem, size = 0x1000, scoped, tag = 'scratch operand']
  %s0 = inlined_call_operand.vmem [shape: f32[2,4,256], index: 0, kind: input, shape index: {}]
  %s1 = inlined_call_operand.hbm [shape: f32[8,12], index: 1, kind: input, shape index: {}]
  %s2 = inlined_call_operand.vmem [shape: f32[1,256], index: 2, kind: input, shape index: {}]
  %s3 = inlined_call_operand.vmem [shape: f32[8,1], index: 3, kind: input, shape index: {}]
  %s4 = inlined_call_operand.vmem [shape: f32[8,1], index: 4, kind: input, shape index: {}]
  %s5 = inlined_call_operand.hbm [shape: f32[2,8,224], index: 5, kind: output, shape index: {}]
  %s6 = sld [smem:[#allocation0]]
  $region73: #{tpu_custom_call.1} parent=0
    _
  %s8 = ssub.s32 1, %s6
  %s9 = scalar_select 0, %s8, %s6
  $region1: #{tpu_custom_call.1} parent=0
    #allocation6 [shape = 'u8[4096]{0}', space=vmem, size = 0x1000, scoped, tag = 'input window, operand 1, single buffered']
    #allocation7 [shape = 's32[2]{0}', space=sflag, size = 0x8, scoped, tag = 'scoped memory for tpu_custom_call.1']
    #allocation8 [shape = 's32[2]{0}', space=sflag, size = 0x8, scoped, tag = 'scoped memory for tpu_custom_call.1']
    #allocation9 [shape = 'u8[16384]{0}', space=vmem, size = 0x4000, scoped, tag = 'output window, operand 0']
    %10 = vsyncpa [#allocation7], 0
    %11 = vsyncpa [#allocation8], 0
    %s12 = scalar_lea.sflag [#allocation8], 1
    %13 = vsyncpa %s12, 0
    loop: start=0, step=1, limit=6
    $region2: #{tpu_custom_call.1} parent=1 // loop_pre_header
      _
    $region3: #{tpu_custom_call.1} parent=1 // loop_header
      %s15 = sphi 0, %s19
      %p16 = scmp.ge.s32.totalorder %s15, 6
      %s22 = sphi 0, %s41
      %s23 = sphi 0, %s37
      %s24 = sphi 0, %s33
      %s25 = sphi 0, %s22
      %s26 = sphi 0, %s23
      %s27 = sphi 0, %s24
      %s28 = sphi 0, %s25
      %s29 = sphi 0, %s26
      %s30 = sphi 0, %s27
      %s46 = sphi 0, %s48
      %s49 = sphi 0, %s46
      %s50 = sphi 0, %s49
      %s66 = sphi 0, %s50
      %s70 = sphi 0, %s70
      %s72 = sphi 0, %s70
      %s73 = sphi 0, %s72
      %s87 = sphi 0, %s73
      %s91 = sphi 0, %s91
      %s93 = sphi 0, %s91
      %s94 = sphi 0, %s93
      %s108 = sphi 0, %s94
      %s112 = sphi 0, %s112
      %s114 = sphi 0, %s112
      %s115 = sphi 0, %s114
      %s129 = sphi 0, %s115
      %s133 = sphi 0, %s133
      %s135 = sphi 0, %s133
      %s136 = sphi 0, %s135
      %s150 = sphi 0, %s136
      %s162 = sphi 0, %s164
      %s165 = sphi 0, %s162
      %s166 = sphi 0, %s165
      %s182 = sphi 0, %s166
    $region4: #{tpu_custom_call.1} parent=1 // loop_header_branch
      %18 = sbr.rel (%p16) target = $region8
    $region5: #{tpu_custom_call.1} parent=1 // loop_body
      %s20 = ssub.s32 %s15, 1
      %s21 = ssub.s32 %s15, 2
      %s31 = sadd.s32 1, %s24
      %p32 = scmp.ge.s32.totalorder %s31, 1
      %s33 = scalar_select %p32, 0, %s31
      %s34 = sadd.s32 1, %s23
      %s35 = scalar_select %p32, %s34, %s23
      %p36 = scmp.ge.s32.totalorder %s35, 2
      %s37 = scalar_select %p36, 0, %s35
      %s38 = sadd.s32 1, %s22
      %s39 = scalar_select %p36, %s38, %s22
      %p40 = scmp.ge.s32.totalorder %s39, 2
      %s41 = scalar_select %p40, 0, %s39
      %s42 = ssub.s32 %s23, %s37
      %s43 = ssub.s32 %s24, %s33
      %s44 = sor.u32 %s42, %s43
      %p45 = scmp.eq.s32.totalorder %s44, 0
      %s47 = sadd.s32 %s46, 1
      %s48 = scalar_select %p45, %s46, %s47
      %p51 = pneg %p45
      %p52 = scmp.eq.s32.totalorder %s15, 3
      %p53 = por %p51, %p52
      %p54 = scmp.ne.s32.totalorder %s46, %s49
      %p55 = scmp.eq.s32.totalorder %s15, 0
      %p56 = por %p54, %p55
      %p57 = scmp.ne.s32.totalorder %s46, %s49
      %p58 = scmp.eq.s32.totalorder %s20, 3
      %p59 = por %p57, %p58
      %p60 = scmp.ne.s32.totalorder %s49, %s50
      %p61 = scmp.eq.s32.totalorder %s20, 0
      %p62 = por %p60, %p61
      %p63 = scmp.ne.s32.totalorder %s49, %s50
      %p64 = scmp.eq.s32.totalorder %s21, 3
      %p65 = por %p63, %p64
      %p67 = scmp.ne.s32.totalorder %s50, %s66
      %p68 = scmp.eq.s32.totalorder %s21, 0
      %p69 = por %p67, %p68
      %s71 = sadd.s32 %s70, 1
      %p74 = scmp.eq.s32.totalorder %s15, 3
      %p75 = scmp.ne.s32.totalorder %s70, %s72
      %p76 = scmp.eq.s32.totalorder %s15, 0
      %p77 = por %p75, %p76
      %p78 = scmp.ne.s32.totalorder %s70, %s72
      %p79 = scmp.eq.s32.totalorder %s20, 3
      %p80 = por %p78, %p79
      %p81 = scmp.ne.s32.totalorder %s72, %s73
      %p82 = scmp.eq.s32.totalorder %s20, 0
      %p83 = por %p81, %p82
      %p84 = scmp.ne.s32.totalorder %s72, %s73
      %p85 = scmp.eq.s32.totalorder %s21, 3
      %p86 = por %p84, %p85
      %p88 = scmp.ne.s32.totalorder %s73, %s87
      %p89 = scmp.eq.s32.totalorder %s21, 0
      %p90 = por %p88, %p89
      %s92 = sadd.s32 %s91, 1
      %p95 = scmp.eq.s32.totalorder %s15, 3
      %p96 = scmp.ne.s32.totalorder %s91, %s93
      %p97 = scmp.eq.s32.totalorder %s15, 0
      %p98 = por %p96, %p97
      %p99 = scmp.ne.s32.totalorder %s91, %s93
      %p100 = scmp.eq.s32.totalorder %s20, 3
      %p101 = por %p99, %p100
      %p102 = scmp.ne.s32.totalorder %s93, %s94
      %p103 = scmp.eq.s32.totalorder %s20, 0
      %p104 = por %p102, %p103
      %p105 = scmp.ne.s32.totalorder %s93, %s94
      %p106 = scmp.eq.s32.totalorder %s21, 3
      %p107 = por %p105, %p106
      %p109 = scmp.ne.s32.totalorder %s94, %s108
      %p110 = scmp.eq.s32.totalorder %s21, 0
      %p111 = por %p109, %p110
      %s113 = sadd.s32 %s112, 1
      %p116 = scmp.eq.s32.totalorder %s15, 3
      %p117 = scmp.ne.s32.totalorder %s112, %s114
      %p118 = scmp.eq.s32.totalorder %s15, 0
      %p119 = por %p117, %p118
      %p120 = scmp.ne.s32.totalorder %s112, %s114
      %p121 = scmp.eq.s32.totalorder %s20, 3
      %p122 = por %p120, %p121
      %p123 = scmp.ne.s32.totalorder %s114, %s115
      %p124 = scmp.eq.s32.totalorder %s20, 0
      %p125 = por %p123, %p124
      %p126 = scmp.ne.s32.totalorder %s114, %s115
      %p127 = scmp.eq.s32.totalorder %s21, 3
      %p128 = por %p126, %p127
      %p130 = scmp.ne.s32.totalorder %s115, %s129
      %p131 = scmp.eq.s32.totalorder %s21, 0
      %p132 = por %p130, %p131
      %s134 = sadd.s32 %s133, 1
      %p137 = scmp.eq.s32.totalorder %s15, 3
      %p138 = scmp.ne.s32.totalorder %s133, %s135
      %p139 = scmp.eq.s32.totalorder %s15, 0
      %p140 = por %p138, %p139
      %p141 = scmp.ne.s32.totalorder %s133, %s135
      %p142 = scmp.eq.s32.totalorder %s20, 3
      %p143 = por %p141, %p142
      %p144 = scmp.ne.s32.totalorder %s135, %s136
      %p145 = scmp.eq.s32.totalorder %s20, 0
      %p146 = por %p144, %p145
      %p147 = scmp.ne.s32.totalorder %s135, %s136
      %p148 = scmp.eq.s32.totalorder %s21, 3
      %p149 = por %p147, %p148
      %p151 = scmp.ne.s32.totalorder %s136, %s150
      %p152 = scmp.eq.s32.totalorder %s21, 0
      %p153 = por %p151, %p152
      %s154 = smul.u32 %s23, %s22
      %s155 = smul.u32 %s24, %s22
      %s156 = smul.u32 %s37, %s41
      %s157 = smul.u32 %s33, %s41
      %s158 = ssub.s32 %s154, %s156
      %s159 = ssub.s32 %s155, %s157
      %s160 = sor.u32 %s158, %s159
      %p161 = scmp.eq.s32.totalorder %s160, 0
      %s163 = sadd.s32 %s162, 1
      %s164 = scalar_select %p161, %s162, %s163
      %p167 = pneg %p161
      %p168 = scmp.eq.s32.totalorder %s15, 3
      %p169 = por %p167, %p168
      %p170 = scmp.ne.s32.totalorder %s162, %s165
      %p171 = scmp.eq.s32.totalorder %s15, 0
      %p172 = por %p170, %p171
      %p173 = scmp.ne.s32.totalorder %s162, %s165
      %p174 = scmp.eq.s32.totalorder %s20, 3
      %p175 = por %p173, %p174
      %p176 = scmp.ne.s32.totalorder %s165, %s166
      %p177 = scmp.eq.s32.totalorder %s20, 0
      %p178 = por %p176, %p177
      %p179 = scmp.ne.s32.totalorder %s165, %s166
      %p180 = scmp.eq.s32.totalorder %s21, 3
      %p181 = por %p179, %p180
      %p183 = scmp.ne.s32.totalorder %s166, %s182
      %p184 = scmp.eq.s32.totalorder %s21, 0
      %p185 = por %p183, %p184
      %p186 = scmp.le.s32.totalorder 1, %s15
      %p187 = scmp.lt.s32.totalorder %s15, 5
      %p188 = pnand %p186, %p187
      %p189 = pneg %p188
      // Predicated region
      $region9: #{tpu_custom_call.1} parent=5 // pred_check
        _
      $region10: #{tpu_custom_call.1} parent=5 // pred_check_branch
        %191 = sbr.rel (%p188) target = $region12
      $region11: #{tpu_custom_call.1} parent=5 // pred_region
        %s192 = ssub.s32 %s15, 1
        // Predicated region
        $region13: #{tpu_custom_call.1} parent=11 // pred_check
          %p193 = pneg %p83
        $region14: #{tpu_custom_call.1} parent=11 // pred_check_branch
          %195 = sbr.rel (%p193) target = $region16
        $region15: #{tpu_custom_call.1} parent=11 // pred_region
          %s197 = ssub.s32 128, 128
          %198 = vsyncadd [#allocation7], %s197
          %s200 = sshll.u32 [#allocation6], 4
          %s201 = int_to_ptr.vmem [resolvable:$true] %s200
          %203 = dma.hbm_to_vmem [thread:$0]  %s1, 128, %s201, [#allocation7]
        $region16: #{tpu_custom_call.1} parent=11 // pred_fallthru
          _
        // Predicated region
        $region17: #{tpu_custom_call.1} parent=11 // pred_check
          %p204 = pneg %p104
        $region18: #{tpu_custom_call.1} parent=11 // pred_check_branch
          %206 = sbr.rel (%p204) target = $region20
        $region19: #{tpu_custom_call.1} parent=11 // pred_region
          _
        $region20: #{tpu_custom_call.1} parent=11 // pred_fallthru
          _
        // Predicated region
        $region21: #{tpu_custom_call.1} parent=11 // pred_check
          %p207 = pneg %p125
        $region22: #{tpu_custom_call.1} parent=11 // pred_check_branch
          %209 = sbr.rel (%p207) target = $region24
        $region23: #{tpu_custom_call.1} parent=11 // pred_region
          _
        $region24: #{tpu_custom_call.1} parent=11 // pred_fallthru
          _
        // Predicated region
        $region25: #{tpu_custom_call.1} parent=11 // pred_check
          %p210 = pneg %p146
        $region26: #{tpu_custom_call.1} parent=11 // pred_check_branch
          %212 = sbr.rel (%p210) target = $region28
        $region27: #{tpu_custom_call.1} parent=11 // pred_region
          _
        $region28: #{tpu_custom_call.1} parent=11 // pred_fallthru
          _
      $region12: #{tpu_custom_call.1} parent=5 // pred_fallthru
        _
      %p213 = scmp.lt.s32.totalorder %s15, 4
      // Predicated region
      $region29: #{tpu_custom_call.1} parent=5 // pred_check
        %p214 = pneg %p213
      $region30: #{tpu_custom_call.1} parent=5 // pred_check_branch
        %216 = sbr.rel (%p214) target = $region32
      $region31: #{tpu_custom_call.1} parent=5 // pred_region
        // Predicated region
        $region33: #{tpu_custom_call.1} parent=31 // pred_check
          %p217 = pneg %p56
        $region34: #{tpu_custom_call.1} parent=31 // pred_check_branch
          %219 = sbr.rel (%p217) target = $region36
        $region35: #{tpu_custom_call.1} parent=31 // pred_region
          %s220 = smul.u32 2, %s24
          %p221 = scmp.lt.s32.totalorder %s23, 1
          %s222 = scalar_select %p221, %s23, 1
          %p223 = scmp.lt.s32.totalorder %s220, 1
          %s224 = scalar_select %p223, %s220, 1
          %s225 = smul.addr %s222, 2
          %s226 = sadd.s32 %s224, %s225
          %s227 = smul.addr %s226, 4
          %s228 = scalar_lea.vmem %s0, %s227
          %s229 = smul.u32 2, %s24
        $region36: #{tpu_custom_call.1} parent=31 // pred_fallthru
          _
      $region32: #{tpu_custom_call.1} parent=5 // pred_fallthru
        _
      %p230 = scmp.le.s32.totalorder 1, %s15
      %p231 = scmp.lt.s32.totalorder %s15, 5
      %p232 = pnand %p230, %p231
      %p233 = pneg %p232
      // Predicated region
      $region37: #{tpu_custom_call.1} parent=5 // pred_check
        _
      $region38: #{tpu_custom_call.1} parent=5 // pred_check_branch
        %235 = sbr.rel (%p232) target = $region40
      $region39: #{tpu_custom_call.1} parent=5 // pred_region
        %s236 = ssub.s32 %s15, 1
        // Predicated region
        $region41: #{tpu_custom_call.1} parent=39 // pred_check
          %p237 = pneg %p83
        $region42: #{tpu_custom_call.1} parent=39 // pred_check_branch
          %239 = sbr.rel (%p237) target = $region44
        $region43: #{tpu_custom_call.1} parent=39 // pred_region
          %240 = dma.done [#allocation7], 128
        $region44: #{tpu_custom_call.1} parent=39 // pred_fallthru
          _
        %s241 = smul.u32 2, %s27
        %p242 = scmp.lt.s32.totalorder %s26, 1
        %s243 = scalar_select %p242, %s26, 1
        %p244 = scmp.lt.s32.totalorder %s241, 1
        %s245 = scalar_select %p244, %s241, 1
        %s246 = smul.addr %s243, 2
        %s247 = sadd.s32 %s245, %s246
        %s248 = smul.addr %s247, 4
        %s249 = scalar_lea.vmem %s0, %s248
        %p250 = pneg %p62
        %p251 = pneg %p59
        %p252 = pneg %p83
        %p253 = pneg %p80
        %p254 = pneg %p104
        %p255 = pneg %p101
        %p256 = pneg %p125
        %p257 = pneg %p122
        %p258 = pneg %p146
        %p259 = pneg %p143
        %p260 = pneg %p178
        %p261 = pneg %p175
        %s262 = sand.u32 %s165, 1
        %s263 = scalar_lea.sflag [#allocation8], %s262
        %s264 = sand.u32 %s165, 1
        %s265 = smul.addr %s264, 16
        %s266 = scalar_lea.vmem [#allocation9], %s265
        %s267 = smul.u32 2, %s27
        %p268 = scmp.lt.s32.totalorder %s26, 1
        %s269 = scalar_select %p268, %s26, 1
        %p270 = scmp.lt.s32.totalorder %s267, 1
        %s271 = scalar_select %p270, %s267, 1
        %s272 = smul.addr %s269, 2
        %s273 = sadd.s32 %s271, %s272
        %s274 = smul.addr %s273, 4
        %s275 = scalar_lea.vmem %s0, %s274
        %s276 = smul.u32 2, %s27
        %s277 = smul.u32 %s26, %s25
        %s278 = smul.u32 %s27, %s25
        %s279 = smul.u32 2, %s278
        %p280 = scmp.eq.s32.totalorder %s25, 0
        %p281 = scmp.eq.s32.totalorder %s26, 0
        %p282 = pnand %p280, %p281
        %p283 = pneg %p282
        %p284 = scmp.eq.s32.totalorder %s27, 0
        %p285 = pnand %p283, %p284
        %p286 = pneg %p285
        // Predicated region
        $region45: #{tpu_custom_call.1} parent=39 // pred_check
          _
        $region46: #{tpu_custom_call.1} parent=39 // pred_check_branch
          %288 = sbr.rel (%p285) target = $region48
        $region47: #{tpu_custom_call.1} parent=39 // pred_region
          %289 = vst [vmem:[#allocation2] sm:$0xff] 0.0
          %290 = vst [vmem:[#allocation3] sm:$0xff] 0.0
        $region48: #{tpu_custom_call.1} parent=39 // pred_fallthru
          _
        %v291 = vld [vmem:[%s275] sm:$0xff]
        %v293 = vcombine.high %v291, %v291
        %295 = vrot.lane.b32.xlu0 %v291, 127
        %v296 = vpop.permute.xlu0 %295
        %297 = vrot.lane.b32.xlu0 %v293, 127
        %v298 = vpop.permute.xlu0 %297
        %v299 = vlaneseq
        %v300 = vand.u32 %v299, 127
        %vm301 = vcmp.lt.s32.totalorder %v300, 127
        %v302 = vsel %vm301, %v296, %v298
        %v303 = vsel %vm301, %v298, %v296
        %304 = vrot.lane.b32.xlu0 %v291, 126
        %v305 = vpop.permute.xlu0 %304
        %306 = vrot.lane.b32.xlu0 %v293, 126
        %v307 = vpop.permute.xlu0 %306
        %vm308 = vcmp.lt.s32.totalorder %v300, 126
        %v309 = vsel %vm308, %v305, %v307
        %v310 = vsel %vm308, %v307, %v305
        %v313 = vrot.slane %v302, 4
        %v314 = vrot.slane %v303, 4
        %vm317 = vcmask 1043456
        %v318 = vsel %vm317, %v291, %v313
        %v319 = vsel %vm317, %v293, %v314
        %v320 = vld [vmem:[#allocation6] sm:$0xff]
        %vm321 = vcmask 97280
        %v323 = vsel %vm321, %v320, 0
        %v326 = vsel %vm317, %v309, 0
        %v329 = vsel %vm317, %v310, 0
        %331 = vmatprep.subr.mxu0 %v319
        %332 = vmatpush1.msra.mxu0 %v318
        %333 = vmatprep.subr.mxu0 %v329
        %334 = vmatpush1.msra.mxu0 %v326
        %335 = vmatprep.subr.mxu0 0.0
        %336 = vmatpush1.msra.mxu0 0.0
        %337 = vmatprep.subr.mxu0 0.0
        %338 = vmatpush1.msra.mxu0 0.0
        %339 = vmatprep.subr.mxu0 0.0
        %340 = vmatpush1.msra.mxu0 0.0
        %341 = vmatprep.subr.mxu0 0.0
        %342 = vmatpush1.msra.mxu0 0.0
        %343 = vmatprep.subr.mxu0 0.0
        %344 = vmatpush1.msra.mxu0 0.0
        %345 = vmatprep.subr.mxu0 0.0
        %346 = vmatpush1.msra.mxu0 0.0
        %347 = vmatprep.subr.mxu0 0.0
        %348 = vmatpush1.msra.mxu0 0.0
        %349 = vmatprep.subr.mxu0 0.0
        %350 = vmatpush1.msra.mxu0 0.0
        %351 = vmatprep.subr.mxu0 0.0
        %352 = vmatpush1.msra.mxu0 0.0
        %353 = vmatprep.subr.mxu0 0.0
        %354 = vmatpush1.msra.mxu0 0.0
        %355 = vmatprep.subr.mxu0 0.0
        %356 = vmatpush1.msra.mxu0 0.0
        %357 = vmatprep.subr.mxu0 0.0
        %358 = vmatpush1.msra.mxu0 0.0
        %359 = vmatprep.subr.mxu0 0.0
        %360 = vmatpush1.msra.mxu0 0.0
        %361 = vmatprep.subr.mxu0 0.0
        %362 = vmatpush1.msra.mxu0 0.0
        %363 = vmatprep.subr.mxu0 0.0
        %364 = vmatpush1.msra.mxu0 0.0
        %365 = vmatprep.subr.mxu0 0.0
        %366 = vmatpush1.msra.mxu0 0.0
        %367 = vmatprep.subr.mxu0 0.0
        %368 = vmatpush1.msra.mxu0 0.0
        %369 = vmatprep.subr.mxu0 0.0
        %370 = vmatpush1.msra.mxu0 0.0
        %371 = vmatprep.subr.mxu0 0.0
        %372 = vmatpush1.msra.mxu0 0.0
        %373 = vmatprep.subr.mxu0 0.0
        %374 = vmatpush1.msra.mxu0 0.0
        %375 = vmatprep.subr.mxu0 0.0
        %376 = vmatpush1.msra.mxu0 0.0
        %377 = vmatprep.subr.mxu0 0.0
        %378 = vmatpush1.msra.mxu0 0.0
        %379 = vmatprep.subr.mxu0 0.0
        %380 = vmatpush1.msra.mxu0 0.0
        %381 = vmatprep.subr.mxu0 0.0
        %382 = vmatpush1.msra.mxu0 0.0
        %383 = vmatprep.subr.mxu0 0.0
        %384 = vmatpush1.msra.mxu0 0.0
        %385 = vmatprep.subr.mxu0 0.0
        %386 = vmatpush1.msra.mxu0 0.0
        %387 = vmatprep.subr.mxu0 0.0
        %388 = vmatpush1.msra.mxu0 0.0
        %389 = vmatprep.subr.mxu0 0.0
        %390 = vmatpush1.msra.mxu0 0.0
        %391 = vmatprep.subr.mxu0 0.0
        %392 = vmatpush1.msra.mxu0 0.0
        %393 = vmatprep.subr.mxu0 0.0
        %394 = vmatpush1.msra.mxu0 0.0
        %395 = vmatprep.mubr.f32.mxu0 0.0
        %396 = vmatmul.mubr.f32.gmra.mrb[0].mxu0 %v323
        %v397 = vpop.f32.mrb[0].mxu0
        %v398 = vadd.f32 0.0, %v397
        %v399 = vpop.f32.mrb[0].mxu0
        %v400 = vadd.f32 0.0, %v399
        %401 = vdwg.mxu0
        // Predicated region
        $region49: #{tpu_custom_call.1} parent=39 // pred_check
          %p402 = pneg %p280
        $region50: #{tpu_custom_call.1} parent=39 // pred_check_branch
          %404 = sbr.rel (%p402) target = $region52
        $region51: #{tpu_custom_call.1} parent=39 // pred_region
          %v405 = vld [vmem:[%s2] sm:$0x3]
          %v407 = vlaneseq
          %v408 = vshrl.u32 %v407, 7
          %v409 = vsub.s32 0, %v408
          %v410 = vrot.slane %v405, %v409
          %v411 = vlaneseq
          %v412 = vshrl.u32 %v411, 7
          %v413 = vsub.s32 1, %v412
          %v414 = vrot.slane %v405, %v413
          %v417 = vmul.f32 %v398, %v410
          %v418 = vmul.f32 %v400, %v414
          %v419 = vld [vmem:[#allocation2] sm:$0xff]
          %v420 = vadd.f32 %v419, %v417
          %421 = vst [vmem:[#allocation2] sm:$0xff] %v420
          %v422 = vld [vmem:[#allocation3] sm:$0xff]
          %v423 = vmul.f32 %v417, %v417
          %v424 = vadd.f32 %v422, %v423
          %425 = vst [vmem:[#allocation3] sm:$0xff] %v424
          %v426 = vld [vmem:[#allocation2] sm:$0xff]
          %v427 = vadd.f32 %v426, %v418
          %428 = vst [vmem:[#allocation2] sm:$0xff] %v427
          %v429 = vld [vmem:[#allocation3] sm:$0xff]
          %v430 = vmul.f32 %v418, %v418
          %v431 = vadd.f32 %v429, %v430
          %432 = vst [vmem:[#allocation3] sm:$0xff] %v431
        $region52: #{tpu_custom_call.1} parent=39 // pred_fallthru
          _
        %p433 = scmp.eq.s32.totalorder %s25, 1
        %p434 = pnand %p433, %p281
        %p435 = pneg %p434
        %p436 = pnand %p435, %p284
        %p437 = pneg %p436
        // Predicated region
        $region53: #{tpu_custom_call.1} parent=39 // pred_check
          _
        $region54: #{tpu_custom_call.1} parent=39 // pred_check_branch
          %439 = sbr.rel (%p436) target = $region56
        $region55: #{tpu_custom_call.1} parent=39 // pred_region
          %v440 = vld [vmem:[#allocation2] sm:$0xff]
          %441 = vadd.xlane.f32.xlu0 %v440
          %v442 = vpop.xlane.xlu0 %441
          %v443 = vld [vmem:[#allocation3] sm:$0xff]
          %444 = vadd.xlane.f32.xlu0 %v443
          %v445 = vpop.xlane.xlu0 %444
          %v446 = vmul.f32 %v442, 0.002232143
          %v447 = vmul.f32 %v445, 0.002232143
          %v448 = vmul.f32 %v446, %v446
          %v449 = vsub.f32 %v447, %v448
          %v450 = vmax.f32 %v449, 0.0
          %v451 = vadd.f32 %v450, 0.001
          %v452 = vrsqrt.pop %v451
          %v453 = vld [vmem:[%s3] sm:$0xff]
          %v454 = vmul.f32 %v453, %v452
          %vm455 = vcmask 7168
          %456 = vst.msk [vmem:[#allocation4] sm:$0xff] %vm455, %v454
          %v457 = vld [vmem:[%s4] sm:$0xff]
          %v458 = vld [vmem:[%s3] sm:$0xff]
          %v459 = vmul.f32 %v446, %v458
          %v460 = vmul.f32 %v459, %v452
          %v461 = vsub.f32 %v457, %v460
          %462 = vst.msk [vmem:[#allocation5] sm:$0xff] %vm455, %v461
        $region56: #{tpu_custom_call.1} parent=39 // pred_fallthru
          _
        // Predicated region
        $region57: #{tpu_custom_call.1} parent=39 // pred_check
          %p463 = pneg %p433
        $region58: #{tpu_custom_call.1} parent=39 // pred_check_branch
          %465 = sbr.rel (%p463) target = $region60
        $region59: #{tpu_custom_call.1} parent=39 // pred_region
          %467 = vrot.lane.b32.xlu0 %v398, 126
          %v468 = vpop.permute.xlu0 %467
          %470 = vrot.lane.b32.xlu0 %v398, 124
          %v471 = vpop.permute.xlu0 %470
          %473 = vrot.lane.b32.xlu0 %v398, 122
          %v474 = vpop.permute.xlu0 %473
          %476 = vrot.lane.b32.xlu0 %v398, 120
          %v477 = vpop.permute.xlu0 %476
          %479 = vrot.lane.b32.xlu0 %v398, 118
          %v480 = vpop.permute.xlu0 %479
          %482 = vrot.lane.b32.xlu0 %v398, 116
          %v483 = vpop.permute.xlu0 %482
          %485 = vrot.lane.b32.xlu0 %v398, 114
          %v486 = vpop.permute.xlu0 %485
          %489 = vrot.lane.b32.xlu0 %v400, 112
          %v490 = vpop.permute.xlu0 %489
          %492 = vrot.lane.b32.xlu0 %v400, 110
          %v493 = vpop.permute.xlu0 %492
          %495 = vrot.lane.b32.xlu0 %v400, 108
          %v496 = vpop.permute.xlu0 %495
          %498 = vrot.lane.b32.xlu0 %v400, 106
          %v499 = vpop.permute.xlu0 %498
          %501 = vrot.lane.b32.xlu0 %v400, 104
          %v502 = vpop.permute.xlu0 %501
          %504 = vrot.lane.b32.xlu0 %v400, 102
          %v505 = vpop.permute.xlu0 %504
          %507 = vrot.lane.b32.xlu0 %v400, 100
          %v508 = vpop.permute.xlu0 %507
          %510 = vrot.lane.b32.xlu0 %v400, 98
          %v511 = vpop.permute.xlu0 %510
          %vm513 = vcmask 113664
          %v514 = vsel %vm513, %v398, %v468
          %vm515 = vcmask 228352
          %v516 = vsel %vm515, %v514, %v471
          %vm517 = vcmask 343040
          %v518 = vsel %vm517, %v516, %v474
          %vm519 = vcmask 457728
          %v520 = vsel %vm519, %v518, %v477
          %vm521 = vcmask 572416
          %v522 = vsel %vm521, %v520, %v480
          %vm523 = vcmask 687104
          %v524 = vsel %vm523, %v522, %v483
          %vm525 = vcmask 801792
          %v526 = vsel %vm525, %v524, %v486
          %vm527 = vcmask 916480
          %v528 = vsel %vm527, %v526, %v490
          %vm529 = vcmask 1031168
          %v530 = vsel %vm529, %v528, %v493
          %v531 = vsel %vm321, %v493, %v496
          %vm532 = vcmask 211968
          %v533 = vsel %vm532, %v531, %v499
          %vm534 = vcmask 326656
          %v535 = vsel %vm534, %v533, %v502
          %vm536 = vcmask 441344
          %v537 = vsel %vm536, %v535, %v505
          %vm538 = vcmask 556032
          %v539 = vsel %vm538, %v537, %v508
          %vm540 = vcmask 670720
          %v541 = vsel %vm540, %v539, %v511
          %v542 = vld [vmem:[#allocation4] sm:$0xff]
          %544 = vset.pattern.permute.xlu0 0
          %545 = vperm.xlu0 %544, %v542
          %v546 = vpop.permute.xlu0 %545
          %v548 = vmul.f32 %v530, %v546
          %v549 = vmul.f32 %v541, %v546
          %v550 = vld [vmem:[#allocation5] sm:$0xff]
          %552 = vset.pattern.permute.xlu0 0
          %553 = vperm.xlu0 %552, %v550
          %v554 = vpop.permute.xlu0 %553
          %v556 = vadd.f32 %v548, %v554
          %v557 = vadd.f32 %v549, %v554
          %v558 = vmax.f32 %v556, 0.0
          %v559 = vmax.f32 %v557, 0.0
          %560 = vst [vmem:[%s266] sm:$0xff] %v558
          %vm561 = vcmask 785408
          %562 = vst.msk [vmem:[%s266 + $0x8] sm:$0xff] %vm561, %v559
        $region60: #{tpu_custom_call.1} parent=39 // pred_fallthru
          _
        %s563 = sand.u32 %s165, 1
        %s564 = scalar_lea.sflag [#allocation8], %s563
        %s565 = sand.u32 %s165, 1
        %s566 = smul.addr %s565, 16
        %s567 = scalar_lea.vmem [#allocation9], %s566
        // Predicated region
        $region61: #{tpu_custom_call.1} parent=39 // pred_check
          %p568 = pneg %p175
        $region62: #{tpu_custom_call.1} parent=39 // pred_check_branch
          %570 = sbr.rel (%p568) target = $region64
        $region63: #{tpu_custom_call.1} parent=39 // pred_region
          %s571 = smul.u32 %s26, %s25
          %s572 = smul.u32 %s27, %s25
          %s573 = smul.u32 2, %s572
          %s575 = ssub.s32 256, 256
          %576 = vsyncadd %s564, %s575
          %s577 = smul.addr %s571, 2
          %s578 = sadd.s32 %s573, %s577
          %s579 = smul.addr %s578, 128
          %s580 = scalar_lea.hbm %s5, %s579
          %s582 = sshll.u32 %s567, 4
          %s583 = int_to_ptr.vmem [resolvable:$true] %s582
          %585 = dma.vmem_to_hbm [thread:$0]  %s583, 256, %s580, %s564
        $region64: #{tpu_custom_call.1} parent=39 // pred_fallthru
          _
      $region40: #{tpu_custom_call.1} parent=5 // pred_fallthru
        _
      %p586 = scmp.le.s32.totalorder 2, %s15
      // Predicated region
      $region65: #{tpu_custom_call.1} parent=5 // pred_check
        %p587 = pneg %p586
      $region66: #{tpu_custom_call.1} parent=5 // pred_check_branch
        %589 = sbr.rel (%p587) target = $region68
      $region67: #{tpu_custom_call.1} parent=5 // pred_region
        %s590 = ssub.s32 %s15, 2
        // Predicated region
        $region69: #{tpu_custom_call.1} parent=67 // pred_check
          %p591 = pneg %p181
        $region70: #{tpu_custom_call.1} parent=67 // pred_check_branch
          %593 = sbr.rel (%p591) target = $region72
        $region71: #{tpu_custom_call.1} parent=67 // pred_region
          %s594 = sand.u32 %s166, 1
          %s595 = scalar_lea.sflag [#allocation8], %s594
          %s596 = sand.u32 %s166, 1
          %s597 = smul.addr %s596, 16
          %s598 = scalar_lea.vmem [#allocation9], %s597
          %599 = dma.done %s595, 256
        $region72: #{tpu_custom_call.1} parent=67 // pred_fallthru
          _
      $region68: #{tpu_custom_call.1} parent=5 // pred_fallthru
        _
    $region6: #{tpu_custom_call.1} parent=1 // loop_footer
      %s19 = sadd.s32 1, %s15
    $region7: #{tpu_custom_call.1} parent=1 // loop_footer_branch
      %14 = sbr.rel target = $region3
    $region8: #{tpu_custom_call.1} parent=1 // loop_exit
      _
    %600 = vsyncpa [#allocation7], 1
    %s601 = scalar_lea.sflag [#allocation7], 1
    %602 = vsyncpa %s601, 1
    %603 = vsyncpa [#allocation8], 1
    %s604 = scalar_lea.sflag [#allocation8], 1
    %605 = vsyncpa %s604, 1

</llo_original>
